<compile_context>
chip_gen: v7x
topology: tpu7x:2x2x1
jax: 0.10.0
libtpu: 0.0.40
codegen_flags: <defaults>
</compile_context>

<pallas_src>
import jax
import jax.numpy as jnp
from jax.experimental import pallas as pl
from jax.experimental.pallas import tpu as pltpu

K_NN = 3  # torch.topk(..., k=3, largest=False)


def _fp_kernel(x1t_ref, x2_ref, fea1_ref, fea2_ref,
               w1a_ref, w1b_ref, b1_ref, w2_ref, b2_ref,
               out_ref):
    f32 = jnp.float32
    x1t = x1t_ref[...]                       # (3, TN)  f32
    x2 = x2_ref[...]                         # (S, 3)   f32
    s = x2.shape[0]
    tn = x1t.shape[1]

    # ---- pairwise squared distances (S, TN), cross term on the MXU ----------
    sq1 = jnp.sum(x1t * x1t, axis=0, keepdims=True)                  # (1, TN)
    sq2 = jnp.sum(x2 * x2, axis=1, keepdims=True)                    # (S, 1)
    cross = jnp.dot(x2, x1t, preferred_element_type=f32)             # (S, TN)
    d = jnp.maximum(sq2 + sq1 - 2.0 * cross, 0.0)                    # (S, TN)

    # ---- 3-NN selection: one packed-key min reduction per neighbor ----------
    # d >= 0  =>  its f32 bit pattern is monotone as int32; stash the source
    # index in the low bits so a single min yields both value-order and argmin.
    idx_bits = max(1, (s - 1).bit_length())
    low_mask = (1 << idx_bits) - 1
    iota = jax.lax.broadcasted_iota(jnp.int32, (s, tn), 0)           # source idx
    keys = (pltpu.bitcast(d, jnp.int32) & (~low_mask)) | iota        # (S, TN)
    nn_mask = jnp.zeros((s, tn), jnp.bool_)
    for _ in range(K_NN):
        kmin = jnp.min(keys, axis=0, keepdims=True)                  # (1, TN)
        onehot = iota == (kmin & low_mask)                           # (S, TN)
        nn_mask = jnp.logical_or(nn_mask, onehot)
        keys = jnp.where(onehot, jnp.int32(2**31 - 1), keys)         # drop picked

    # inverse-distance weights (exact distances), normalized per target point
    recip = nn_mask.astype(f32) / jnp.maximum(d, 1e-8)               # (S, TN)
    wt = recip / jnp.sum(recip, axis=0, keepdims=True)               # (S, TN) f32

    # ---- weighted interpolation of the sparse features (MXU) ----------------
    interp = jnp.dot(fea2_ref[...], wt.astype(fea2_ref.dtype),
                     preferred_element_type=f32)                     # (D2, TN)

    # ---- MLP: Conv1d(k=1)+BN(eval, scale folded into W)+ReLU, twice ---------
    h = (jnp.dot(w1a_ref[...], fea1_ref[...], preferred_element_type=f32)
         + jnp.dot(w1b_ref[...], interp.astype(w1b_ref.dtype),
                   preferred_element_type=f32))
    h = jnp.maximum(h + b1_ref[...], 0.0)                            # (C1, TN)

    h = jnp.dot(w2_ref[...], h.astype(w2_ref.dtype), preferred_element_type=f32)
    out_ref[...] = jnp.maximum(h + b2_ref[...], 0.0).astype(out_ref.dtype)


def feature_propagation(points_xyz1, points_xyz2, points_fea1, points_fea2,
                        params, *, feature_dtype=jnp.bfloat16, tile_n=None):
    """xyz1:(B,N,3) xyz2:(B,S,3) fea1:(B,D1,N) fea2:(B,D2,S) -> (B,C_out,N)."""
    w1a, w1b, b1, w2, b2 = params
    B, N, _ = points_xyz1.shape
    S = points_xyz2.shape[1]
    D1 = points_fea1.shape[1]
    D2 = points_fea2.shape[1]
    C1 = w1a.shape[0]
    C2 = w2.shape[0]

    # ---- N-tile choice: lane-dense tiles, bounded NN temporaries ------------
    if tile_n is not None:
        tn = tile_n
    elif N % 128 != 0:
        tn = N                                    # small / ragged: one tile
    else:
        tn = 128
        # ~6 live f32 (S, TN) temporaries in the NN phase + streamed tiles
        while (tn * 2 <= 1024 and N % (tn * 2) == 0
               and (6 * S + 2 * (D1 + C2 + 3)) * (tn * 2) * 4 < 40 * 1024 * 1024):
            tn *= 2
    assert N % tn == 0, (N, tn)

    esize = jnp.dtype(feature_dtype).itemsize
    est = (6 * S * tn * 4                                      # NN temporaries
           + 2 * (3 * tn * 4 + S * 3 * 4                       # xyz tiles (x2 buf)
                  + D1 * tn * esize + D2 * S * esize           # feature tiles
                  + C2 * tn * 4)                               # output tile
           + (C1 * (D1 + D2) + C2 * C1) * esize + (C1 + C2) * 4)
    vmem_limit = int(min(max(2 * est, 32 * 1024 * 1024), 48 * 1024 * 1024))

    xyz1t = jnp.transpose(points_xyz1, (0, 2, 1)).astype(jnp.float32)  # (B,3,N)
    xyz2 = points_xyz2.astype(jnp.float32)                             # (B,S,3)
    fea1 = points_fea1.astype(feature_dtype)                           # (B,D1,N)
    fea2 = points_fea2.astype(feature_dtype)                           # (B,D2,S)

    out = pl.pallas_call(
        _fp_kernel,
        out_shape=jax.ShapeDtypeStruct((B, C2, N), jnp.float32),
        grid=(B, N // tn),
        in_specs=[
            pl.BlockSpec((None, 3, tn), lambda b, n: (b, 0, n)),   # xyz1^T tile
            pl.BlockSpec((None, S, 3), lambda b, n: (b, 0, 0)),    # xyz2 (resident)
            pl.BlockSpec((None, D1, tn), lambda b, n: (b, 0, n)),  # fea1 tile
            pl.BlockSpec((None, D2, S), lambda b, n: (b, 0, 0)),   # fea2 (resident)
            pl.BlockSpec((C1, D1), lambda b, n: (0, 0)),           # W1 (skip part)
            pl.BlockSpec((C1, D2), lambda b, n: (0, 0)),           # W1 (interp part)
            pl.BlockSpec((C1, 1), lambda b, n: (0, 0)),            # shift 1
            pl.BlockSpec((C2, C1), lambda b, n: (0, 0)),           # W2
            pl.BlockSpec((C2, 1), lambda b, n: (0, 0)),            # shift 2
        ],
        out_specs=pl.BlockSpec((None, C2, tn), lambda b, n: (b, 0, n)),
        compiler_params=pltpu.CompilerParams(
            dimension_semantics=("parallel", "parallel"),
            vmem_limit_bytes=vmem_limit),
    )(xyz1t, xyz2, fea1, fea2,
      w1a.astype(feature_dtype), w1b.astype(feature_dtype), b1,
      w2.astype(feature_dtype), b2)

    return out                                   # (B, C_out, N), channel-first


def init_params(key, in_channels, mlp_channels, eps=1e-5):
    """Conv1d(k=1)+BN(eval) params, BN folded into the weights (scale) + shift."""
    cin = sum(in_channels)
    chans = [cin] + list(mlp_channels)
    keys = jax.random.split(key, 4 * len(mlp_channels))
    layers = []
    for li, (ci, co) in enumerate(zip(chans[:-1], chans[1:])):
        kw, kb, kg, kbeta = keys[4 * li:4 * li + 4]
        w = jax.random.normal(kw, (co, ci), jnp.float32) / jnp.sqrt(ci)
        bconv = 0.1 * jax.random.normal(kb, (co,), jnp.float32)
        gamma = 1.0 + 0.1 * jax.random.normal(kg, (co,), jnp.float32)
        beta = 0.1 * jax.random.normal(kbeta, (co,), jnp.float32)
        run_mean = jnp.zeros((co,), jnp.float32)
        run_var = jnp.ones((co,), jnp.float32)
        scale = gamma / jnp.sqrt(run_var + eps)
        shift = beta + scale * (bconv - run_mean)
        layers.append((scale[:, None] * w, shift[:, None]))   # fold BN scale
    (w1, b1), (w2, b2) = layers
    d1, _ = in_channels
    return (w1[:, :d1], w1[:, d1:], b1, w2, b2)


def reference_fp(points_xyz1, points_xyz2, points_fea1, points_fea2, params):
    """Pure-JAX reference mirroring the PyTorch forward (f32)."""
    w1a, w1b, b1, w2, b2 = params
    d = jnp.sum((points_xyz1[:, :, None, :] - points_xyz2[:, None, :, :]) ** 2, axis=-1)
    neg_top, idx = jax.lax.top_k(-d, K_NN)
    dists = -neg_top
    recip = 1.0 / jnp.maximum(dists, 1e-8)
    weight = recip / jnp.sum(recip, axis=-1, keepdims=True)           # (B, N, 3)
    fea2_t = jnp.transpose(points_fea2, (0, 2, 1))                    # (B, S, D2)
    gathered = jax.vmap(lambda f, i: f[i])(fea2_t, idx)               # (B, N, 3, D2)
    interp = jnp.sum(gathered * weight[..., None], axis=2)            # (B, N, D2)
    fea1_t = jnp.transpose(points_fea1, (0, 2, 1))                    # (B, N, D1)
    h = jnp.maximum(fea1_t @ w1a.T + interp @ w1b.T + b1[:, 0], 0.0)
    h = jnp.maximum(h @ w2.T + b2[:, 0], 0.0)                         # (B, N, C2)
    return jnp.transpose(h, (0, 2, 1))


if __name__ == "__main__":
    B, N, S, D1, D2 = 2, 16, 8, 8, 8
    MLP = [32, 16]

    key = jax.random.PRNGKey(0)
    k1, k2, k3, k4, kp = jax.random.split(key, 5)
    points_xyz1 = jax.random.normal(k1, (B, N, 3), jnp.float32)
    points_xyz2 = jax.random.normal(k2, (B, S, 3), jnp.float32)
    points_fea1 = jax.random.normal(k3, (B, D1, N), jnp.float32)
    points_fea2 = jax.random.normal(k4, (B, D2, S), jnp.float32)
    params = init_params(kp, [D1, D2], MLP)

    ref = reference_fp(points_xyz1, points_xyz2, points_fea1, points_fea2, params)

    # full-precision path: must match the reference tightly
    out_f32 = feature_propagation(points_xyz1, points_xyz2, points_fea1,
                                  points_fea2, params, feature_dtype=jnp.float32)
    out_f32 = jax.block_until_ready(out_f32)
    assert out_f32.shape == (B, MLP[-1], N), out_f32.shape
    assert jnp.allclose(out_f32, ref, atol=1e-3, rtol=1e-3), \
        float(jnp.max(jnp.abs(out_f32 - ref)))

    # default perf path: bf16 feature matmuls (f32 accumulation), looser check
    out_bf16 = feature_propagation(points_xyz1, points_xyz2, points_fea1,
                                   points_fea2, params)
    out_bf16 = jax.block_until_ready(out_bf16)
    assert out_bf16.shape == (B, MLP[-1], N), out_bf16.shape
    assert jnp.allclose(out_bf16, ref, atol=5e-2, rtol=5e-2), \
        float(jnp.max(jnp.abs(out_bf16 - ref)))

    print("KERNEL_OK")
</pallas_src>

<mosaic_0001>
module attributes {stable_mosaic.version = 11 : i64} {
  func.func @_fp_kernel(%arg0: i32, %arg1: i32, %arg2: memref<1x3x16xf32, #tpu.memory_space<vmem>>, %arg3: memref<1x8x3xf32, #tpu.memory_space<vmem>>, %arg4: memref<1x8x16xf32, #tpu.memory_space<vmem>>, %arg5: memref<1x8x8xf32, #tpu.memory_space<vmem>>, %arg6: memref<32x8xf32, #tpu.memory_space<vmem>>, %arg7: memref<32x8xf32, #tpu.memory_space<vmem>>, %arg8: memref<32x1xf32, #tpu.memory_space<vmem>>, %arg9: memref<16x32xf32, #tpu.memory_space<vmem>>, %arg10: memref<16x1xf32, #tpu.memory_space<vmem>>, %arg11: memref<1x16x16xf32, #tpu.memory_space<vmem>>) attributes {dimension_semantics = [#tpu.dimension_semantics<parallel>, #tpu.dimension_semantics<parallel>], iteration_bounds = array<i64: 2, 1>, scalar_prefetch = 0 : i64, scratch_operands = 0 : i64, tpu.core_type = #tpu.core_type<tc>, window_params = [{transform_indices = @transform_0, window_bounds = array<i64: 1, 3, 16>}, {transform_indices = @transform_1, window_bounds = array<i64: 1, 8, 3>}, {transform_indices = @transform_2, window_bounds = array<i64: 1, 8, 16>}, {transform_indices = @transform_3, window_bounds = array<i64: 1, 8, 8>}, {pipeline_mode = #tpu.pipeline_mode<synchronous>, transform_indices = @transform_4, window_bounds = array<i64: 32, 8>}, {pipeline_mode = #tpu.pipeline_mode<synchronous>, transform_indices = @transform_5, window_bounds = array<i64: 32, 8>}, {pipeline_mode = #tpu.pipeline_mode<synchronous>, transform_indices = @transform_6, window_bounds = array<i64: 32, 1>}, {pipeline_mode = #tpu.pipeline_mode<synchronous>, transform_indices = @transform_7, window_bounds = array<i64: 16, 32>}, {pipeline_mode = #tpu.pipeline_mode<synchronous>, transform_indices = @transform_8, window_bounds = array<i64: 16, 1>}, {transform_indices = @transform_9, window_bounds = array<i64: 1, 16, 16>}]} {
    %c0 = arith.constant 0 : index
    %c0_0 = arith.constant 0 : index
    %c0_1 = arith.constant 0 : index
    %0 = vector.load %arg2[%c0, %c0_0, %c0_1] : memref<1x3x16xf32, #tpu.memory_space<vmem>>, vector<1x3x16xf32>
    %1 = vector.shape_cast %0 : vector<1x3x16xf32> to vector<3x16xf32>
    %c0_2 = arith.constant 0 : index
    %c0_3 = arith.constant 0 : index
    %c0_4 = arith.constant 0 : index
    %2 = vector.load %arg3[%c0_2, %c0_3, %c0_4] : memref<1x8x3xf32, #tpu.memory_space<vmem>>, vector<1x8x3xf32>
    %3 = vector.shape_cast %2 : vector<1x8x3xf32> to vector<8x3xf32>
    %4 = arith.mulf %1, %1 : vector<3x16xf32>
    %cst = arith.constant dense<0.000000e+00> : vector<16xf32>
    %5 = vector.multi_reduction <add>, %4, %cst [0] : vector<3x16xf32> to vector<16xf32>
    %6 = vector.shape_cast %5 : vector<16xf32> to vector<1x16xf32>
    %7 = arith.mulf %3, %3 : vector<8x3xf32>
    %cst_5 = arith.constant dense<0.000000e+00> : vector<8xf32>
    %8 = vector.multi_reduction <add>, %7, %cst_5 [1] : vector<8x3xf32> to vector<8xf32>
    %9 = vector.shape_cast %8 : vector<8xf32> to vector<8x1xf32>
    %cst_6 = arith.constant dense<0.000000e+00> : vector<8x16xf32>
    %10 = tpu.matmul %3, %1, %cst_6 {dimension_numbers = #tpu.dot_dimension_numbers<[1], [0], [0], [1], [0, 0, 1, 1], [], []>} : vector<8x3xf32>, vector<3x16xf32>, vector<8x16xf32> -> vector<8x16xf32>
    %11 = vector.broadcast %9 : vector<8x1xf32> to vector<8x16xf32>
    %12 = vector.broadcast %6 : vector<1x16xf32> to vector<8x16xf32>
    %13 = arith.addf %11, %12 : vector<8x16xf32>
    %cst_7 = arith.constant 2.000000e+00 : f32
    %14 = vector.broadcast %cst_7 : f32 to vector<8x16xf32>
    %15 = arith.mulf %14, %10 : vector<8x16xf32>
    %16 = arith.subf %13, %15 : vector<8x16xf32>
    %cst_8 = arith.constant 0.000000e+00 : f32
    %17 = vector.broadcast %cst_8 : f32 to vector<8x16xf32>
    %18 = arith.maximumf %16, %17 : vector<8x16xf32>
    %19 = tpu.iota {dimensions = array<i32: 0>} : vector<8x16xi32>
    %20 = tpu.bitcast %18 : vector<8x16xf32> -> vector<8x16xi32>
    %c-8_i32 = arith.constant -8 : i32
    %21 = vector.broadcast %c-8_i32 : i32 to vector<8x16xi32>
    %22 = arith.andi %20, %21 : vector<8x16xi32>
    %23 = arith.ori %22, %19 : vector<8x16xi32>
    %false = arith.constant false
    %24 = vector.broadcast %false : i1 to vector<8x16xi1>
    %cst_9 = arith.constant dense<2147483647> : vector<16xi32>
    %25 = vector.multi_reduction <minsi>, %23, %cst_9 [0] : vector<8x16xi32> to vector<16xi32>
    %26 = vector.shape_cast %25 : vector<16xi32> to vector<1x16xi32>
    %c7_i32 = arith.constant 7 : i32
    %27 = vector.broadcast %c7_i32 : i32 to vector<1x16xi32>
    %28 = arith.andi %26, %27 : vector<1x16xi32>
    %29 = vector.broadcast %28 : vector<1x16xi32> to vector<8x16xi32>
    %30 = arith.cmpi eq, %19, %29 : vector<8x16xi32>
    %31 = arith.ori %24, %30 : vector<8x16xi1>
    %c2147483647_i32 = arith.constant 2147483647 : i32
    %32 = vector.broadcast %c2147483647_i32 : i32 to vector<8x16xi32>
    %33 = arith.select %30, %32, %23 : vector<8x16xi1>, vector<8x16xi32>
    %cst_10 = arith.constant dense<2147483647> : vector<16xi32>
    %34 = vector.multi_reduction <minsi>, %33, %cst_10 [0] : vector<8x16xi32> to vector<16xi32>
    %35 = vector.shape_cast %34 : vector<16xi32> to vector<1x16xi32>
    %c7_i32_11 = arith.constant 7 : i32
    %36 = vector.broadcast %c7_i32_11 : i32 to vector<1x16xi32>
    %37 = arith.andi %35, %36 : vector<1x16xi32>
    %38 = vector.broadcast %37 : vector<1x16xi32> to vector<8x16xi32>
    %39 = arith.cmpi eq, %19, %38 : vector<8x16xi32>
    %40 = arith.ori %31, %39 : vector<8x16xi1>
    %c2147483647_i32_12 = arith.constant 2147483647 : i32
    %41 = vector.broadcast %c2147483647_i32_12 : i32 to vector<8x16xi32>
    %42 = arith.select %39, %41, %33 : vector<8x16xi1>, vector<8x16xi32>
    %cst_13 = arith.constant dense<2147483647> : vector<16xi32>
    %43 = vector.multi_reduction <minsi>, %42, %cst_13 [0] : vector<8x16xi32> to vector<16xi32>
    %44 = vector.shape_cast %43 : vector<16xi32> to vector<1x16xi32>
    %c7_i32_14 = arith.constant 7 : i32
    %45 = vector.broadcast %c7_i32_14 : i32 to vector<1x16xi32>
    %46 = arith.andi %44, %45 : vector<1x16xi32>
    %47 = vector.broadcast %46 : vector<1x16xi32> to vector<8x16xi32>
    %48 = arith.cmpi eq, %19, %47 : vector<8x16xi32>
    %49 = arith.ori %40, %48 : vector<8x16xi1>
    %50 = arith.extui %49 : vector<8x16xi1> to vector<8x16xi32>
    %51 = arith.sitofp %50 : vector<8x16xi32> to vector<8x16xf32>
    %cst_15 = arith.constant 9.99999993E-9 : f32
    %52 = vector.broadcast %cst_15 : f32 to vector<8x16xf32>
    %53 = arith.maximumf %18, %52 : vector<8x16xf32>
    %54 = arith.divf %51, %53 : vector<8x16xf32>
    %cst_16 = arith.constant dense<0.000000e+00> : vector<16xf32>
    %55 = vector.multi_reduction <add>, %54, %cst_16 [0] : vector<8x16xf32> to vector<16xf32>
    %56 = vector.shape_cast %55 : vector<16xf32> to vector<1x16xf32>
    %57 = vector.broadcast %56 : vector<1x16xf32> to vector<8x16xf32>
    %58 = arith.divf %54, %57 : vector<8x16xf32>
    %c0_17 = arith.constant 0 : index
    %c0_18 = arith.constant 0 : index
    %c0_19 = arith.constant 0 : index
    %59 = vector.load %arg5[%c0_17, %c0_18, %c0_19] : memref<1x8x8xf32, #tpu.memory_space<vmem>>, vector<1x8x8xf32>
    %60 = vector.shape_cast %59 : vector<1x8x8xf32> to vector<8x8xf32>
    %cst_20 = arith.constant dense<0.000000e+00> : vector<8x16xf32>
    %61 = tpu.matmul %60, %58, %cst_20 {dimension_numbers = #tpu.dot_dimension_numbers<[1], [0], [0], [1], [0, 0, 1, 1], [], []>} : vector<8x8xf32>, vector<8x16xf32>, vector<8x16xf32> -> vector<8x16xf32>
    %c0_21 = arith.constant 0 : index
    %c0_22 = arith.constant 0 : index
    %62 = vector.load %arg6[%c0_21, %c0_22] : memref<32x8xf32, #tpu.memory_space<vmem>>, vector<32x8xf32>
    %c0_23 = arith.constant 0 : index
    %c0_24 = arith.constant 0 : index
    %c0_25 = arith.constant 0 : index
    %63 = vector.load %arg4[%c0_23, %c0_24, %c0_25] : memref<1x8x16xf32, #tpu.memory_space<vmem>>, vector<1x8x16xf32>
    %64 = vector.shape_cast %63 : vector<1x8x16xf32> to vector<8x16xf32>
    %cst_26 = arith.constant dense<0.000000e+00> : vector<32x16xf32>
    %65 = tpu.matmul %62, %64, %cst_26 {dimension_numbers = #tpu.dot_dimension_numbers<[1], [0], [0], [1], [0, 0, 1, 1], [], []>} : vector<32x8xf32>, vector<8x16xf32>, vector<32x16xf32> -> vector<32x16xf32>
    %c0_27 = arith.constant 0 : index
    %c0_28 = arith.constant 0 : index
    %66 = vector.load %arg7[%c0_27, %c0_28] : memref<32x8xf32, #tpu.memory_space<vmem>>, vector<32x8xf32>
    %cst_29 = arith.constant dense<0.000000e+00> : vector<32x16xf32>
    %67 = tpu.matmul %66, %61, %cst_29 {dimension_numbers = #tpu.dot_dimension_numbers<[1], [0], [0], [1], [0, 0, 1, 1], [], []>} : vector<32x8xf32>, vector<8x16xf32>, vector<32x16xf32> -> vector<32x16xf32>
    %68 = arith.addf %65, %67 : vector<32x16xf32>
    %c0_30 = arith.constant 0 : index
    %c0_31 = arith.constant 0 : index
    %69 = vector.load %arg8[%c0_30, %c0_31] : memref<32x1xf32, #tpu.memory_space<vmem>>, vector<32x1xf32>
    %70 = vector.broadcast %69 : vector<32x1xf32> to vector<32x16xf32>
    %71 = arith.addf %68, %70 : vector<32x16xf32>
    %cst_32 = arith.constant 0.000000e+00 : f32
    %72 = vector.broadcast %cst_32 : f32 to vector<32x16xf32>
    %73 = arith.maximumf %71, %72 : vector<32x16xf32>
    %c0_33 = arith.constant 0 : index
    %c0_34 = arith.constant 0 : index
    %74 = vector.load %arg9[%c0_33, %c0_34] : memref<16x32xf32, #tpu.memory_space<vmem>>, vector<16x32xf32>
    %cst_35 = arith.constant dense<0.000000e+00> : vector<16x16xf32>
    %75 = tpu.matmul %74, %73, %cst_35 {dimension_numbers = #tpu.dot_dimension_numbers<[1], [0], [0], [1], [0, 0, 1, 1], [], []>} : vector<16x32xf32>, vector<32x16xf32>, vector<16x16xf32> -> vector<16x16xf32>
    %c0_36 = arith.constant 0 : index
    %c0_37 = arith.constant 0 : index
    %76 = vector.load %arg10[%c0_36, %c0_37] : memref<16x1xf32, #tpu.memory_space<vmem>>, vector<16x1xf32>
    %77 = vector.broadcast %76 : vector<16x1xf32> to vector<16x16xf32>
    %78 = arith.addf %75, %77 : vector<16x16xf32>
    %cst_38 = arith.constant 0.000000e+00 : f32
    %79 = vector.broadcast %cst_38 : f32 to vector<16x16xf32>
    %80 = arith.maximumf %78, %79 : vector<16x16xf32>
    %c0_39 = arith.constant 0 : index
    %c0_40 = arith.constant 0 : index
    %c0_41 = arith.constant 0 : index
    %81 = vector.load %arg11[%c0_39, %c0_40, %c0_41] : memref<1x16x16xf32, #tpu.memory_space<vmem>>, vector<1x16x16xf32>
    %82 = vector.shape_cast %81 : vector<1x16x16xf32> to vector<16x16xf32>
    %83 = vector.shape_cast %80 : vector<16x16xf32> to vector<1x16x16xf32>
    tpu.vector_store %arg11[%c0_39, %c0_40, %c0_41], %83 {strides = array<i32>} : memref<1x16x16xf32, #tpu.memory_space<vmem>>, vector<1x16x16xf32>,
    return
  }
  func.func @transform_0(%arg0: i32, %arg1: i32) -> (i32, i32, i32) {
    %c0_i32 = arith.constant 0 : i32
    %c0_i32_0 = arith.constant 0 : i32
    return %arg0, %c0_i32, %arg1 : i32, i32, i32
  }
  func.func @transform_1(%arg0: i32, %arg1: i32) -> (i32, i32, i32) {
    %c0_i32 = arith.constant 0 : i32
    %c0_i32_0 = arith.constant 0 : i32
    %c0_i32_1 = arith.constant 0 : i32
    return %arg0, %c0_i32, %c0_i32_0 : i32, i32, i32
  }
  func.func @transform_2(%arg0: i32, %arg1: i32) -> (i32, i32, i32) {
    %c0_i32 = arith.constant 0 : i32
    %c0_i32_0 = arith.constant 0 : i32
    return %arg0, %c0_i32, %arg1 : i32, i32, i32
  }
  func.func @transform_3(%arg0: i32, %arg1: i32) -> (i32, i32, i32) {
    %c0_i32 = arith.constant 0 : i32
    %c0_i32_0 = arith.constant 0 : i32
    %c0_i32_1 = arith.constant 0 : i32
    return %arg0, %c0_i32, %c0_i32_0 : i32, i32, i32
  }
  func.func @transform_4(%arg0: i32, %arg1: i32) -> (i32, i32) {
    %c0_i32 = arith.constant 0 : i32
    %c0_i32_0 = arith.constant 0 : i32
    %c0_i32_1 = arith.constant 0 : i32
    return %c0_i32, %c0_i32_0 : i32, i32
  }
  func.func @transform_5(%arg0: i32, %arg1: i32) -> (i32, i32) {
    %c0_i32 = arith.constant 0 : i32
    %c0_i32_0 = arith.constant 0 : i32
    %c0_i32_1 = arith.constant 0 : i32
    return %c0_i32, %c0_i32_0 : i32, i32
  }
  func.func @transform_6(%arg0: i32, %arg1: i32) -> (i32, i32) {
    %c0_i32 = arith.constant 0 : i32
    %c0_i32_0 = arith.constant 0 : i32
    %c0_i32_1 = arith.constant 0 : i32
    return %c0_i32, %c0_i32_0 : i32, i32
  }
  func.func @transform_7(%arg0: i32, %arg1: i32) -> (i32, i32) {
    %c0_i32 = arith.constant 0 : i32
    %c0_i32_0 = arith.constant 0 : i32
    %c0_i32_1 = arith.constant 0 : i32
    return %c0_i32, %c0_i32_0 : i32, i32
  }
  func.func @transform_8(%arg0: i32, %arg1: i32) -> (i32, i32) {
    %c0_i32 = arith.constant 0 : i32
    %c0_i32_0 = arith.constant 0 : i32
    %c0_i32_1 = arith.constant 0 : i32
    return %c0_i32, %c0_i32_0 : i32, i32
  }
  func.func @transform_9(%arg0: i32, %arg1: i32) -> (i32, i32, i32) {
    %c0_i32 = arith.constant 0 : i32
    %c0_i32_0 = arith.constant 0 : i32
    return %arg0, %c0_i32, %arg1 : i32, i32, i32
  }
}

</mosaic_0001>

<llo_original>
// kernel: tpu_custom_call.1
$region0: #{tpu_custom_call.1}
  #allocation0 [shape = 'u32[]', space=smem, size = 0x4, offset = 0x4, fixed_abs, tag = 'smem constant byte address 0x4 - core index']
  #allocation1 [shape = 'u32[144,128]{1,0:T(1,128)}', space=vmem, size = 0x12000, scoped, tag = 'internal scratch']
  %s0 = inlined_call_operand.vmem [shape: f32[2,3,16], index: 0, kind: input, shape index: {}]
  %s1 = inlined_call_operand.vmem [shape: f32[2,8,3], index: 1, kind: input, shape index: {}]
  %s2 = inlined_call_operand.vmem [shape: f32[2,8,16], index: 2, kind: input, shape index: {}]
  %s3 = inlined_call_operand.vmem [shape: f32[2,8,8], index: 3, kind: input, shape index: {}]
  %s4 = inlined_call_operand.vmem [shape: f32[32,8], index: 4, kind: input, shape index: {}]
  %s5 = inlined_call_operand.vmem [shape: f32[32,8], index: 5, kind: input, shape index: {}]
  %s6 = inlined_call_operand.vmem [shape: f32[32,1], index: 6, kind: input, shape index: {}]
  %s7 = inlined_call_operand.vmem [shape: f32[16,32], index: 7, kind: input, shape index: {}]
  %s8 = inlined_call_operand.vmem [shape: f32[16,1], index: 8, kind: input, shape index: {}]
  %s9 = inlined_call_operand.hbm [shape: f32[2,16,16], index: 9, kind: output, shape index: {}]
  %s10 = sld [smem:[#allocation0]]
  $region69: #{tpu_custom_call.1} parent=0
    _
  %s12 = ssub.s32 1, %s10
  %s13 = scalar_select 0, %s12, %s10
  $region1: #{tpu_custom_call.1} parent=0
    #allocation2 [shape = 'u8[16384]{0}', space=vmem, size = 0x4000, scoped, tag = 'output window, operand 0']
    #allocation3 [shape = 's32[2]{0}', space=sflag, size = 0x8, scoped, tag = 'scoped memory for tpu_custom_call.1']
    %14 = vsyncpa [#allocation3], 0
    %s15 = scalar_lea.sflag [#allocation3], 1
    %16 = vsyncpa %s15, 0
    loop: start=0, step=1, limit=4
    $region2: #{tpu_custom_call.1} parent=1 // loop_pre_header
      _
    $region3: #{tpu_custom_call.1} parent=1 // loop_header
      %s18 = sphi 0, %s22
      %p19 = scmp.ge.s32.totalorder %s18, 4
      %s25 = sphi 0, %s37
      %s26 = sphi 0, %s33
      %s27 = sphi 0, %s25
      %s28 = sphi 0, %s26
      %s29 = sphi 0, %s27
      %s30 = sphi 0, %s28
      %s42 = sphi 0, %s44
      %s45 = sphi 0, %s42
      %s46 = sphi 0, %s45
      %s62 = sphi 0, %s46
      %s68 = sphi 0, %s70
      %s71 = sphi 0, %s68
      %s72 = sphi 0, %s71
      %s88 = sphi 0, %s72
      %s96 = sphi 0, %s98
      %s99 = sphi 0, %s96
      %s100 = sphi 0, %s99
      %s116 = sphi 0, %s100
      %s122 = sphi 0, %s124
      %s125 = sphi 0, %s122
      %s126 = sphi 0, %s125
      %s142 = sphi 0, %s126
      %s146 = sphi 0, %s146
      %s148 = sphi 0, %s146
      %s149 = sphi 0, %s148
      %s163 = sphi 0, %s149
      %s167 = sphi 0, %s167
      %s169 = sphi 0, %s167
      %s170 = sphi 0, %s169
      %s184 = sphi 0, %s170
      %s188 = sphi 0, %s188
      %s190 = sphi 0, %s188
      %s191 = sphi 0, %s190
      %s205 = sphi 0, %s191
      %s209 = sphi 0, %s209
      %s211 = sphi 0, %s209
      %s212 = sphi 0, %s211
      %s226 = sphi 0, %s212
      %s230 = sphi 0, %s230
      %s232 = sphi 0, %s230
      %s233 = sphi 0, %s232
      %s247 = sphi 0, %s233
      %s255 = sphi 0, %s257
      %s258 = sphi 0, %s255
      %s259 = sphi 0, %s258
      %s275 = sphi 0, %s259
    $region4: #{tpu_custom_call.1} parent=1 // loop_header_branch
      %21 = sbr.rel (%p19) target = $region8
    $region5: #{tpu_custom_call.1} parent=1 // loop_body
      %s23 = ssub.s32 %s18, 1
      %s24 = ssub.s32 %s18, 2
      %s31 = sadd.s32 1, %s26
      %p32 = scmp.ge.s32.totalorder %s31, 1
      %s33 = scalar_select %p32, 0, %s31
      %s34 = sadd.s32 1, %s25
      %s35 = scalar_select %p32, %s34, %s25
      %p36 = scmp.ge.s32.totalorder %s35, 2
      %s37 = scalar_select %p36, 0, %s35
      %s38 = ssub.s32 %s25, %s37
      %s39 = ssub.s32 %s26, %s33
      %s40 = sor.u32 %s38, %s39
      %p41 = scmp.eq.s32.totalorder %s40, 0
      %s43 = sadd.s32 %s42, 1
      %s44 = scalar_select %p41, %s42, %s43
      %p47 = pneg %p41
      %p48 = scmp.eq.s32.totalorder %s18, 1
      %p49 = por %p47, %p48
      %p50 = scmp.ne.s32.totalorder %s42, %s45
      %p51 = scmp.eq.s32.totalorder %s18, 0
      %p52 = por %p50, %p51
      %p53 = scmp.ne.s32.totalorder %s42, %s45
      %p54 = scmp.eq.s32.totalorder %s23, 1
      %p55 = por %p53, %p54
      %p56 = scmp.ne.s32.totalorder %s45, %s46
      %p57 = scmp.eq.s32.totalorder %s23, 0
      %p58 = por %p56, %p57
      %p59 = scmp.ne.s32.totalorder %s45, %s46
      %p60 = scmp.eq.s32.totalorder %s24, 1
      %p61 = por %p59, %p60
      %p63 = scmp.ne.s32.totalorder %s46, %s62
      %p64 = scmp.eq.s32.totalorder %s24, 0
      %p65 = por %p63, %p64
      %s66 = ssub.s32 %s25, %s37
      %p67 = scmp.eq.s32.totalorder %s66, 0
      %s69 = sadd.s32 %s68, 1
      %s70 = scalar_select %p67, %s68, %s69
      %p73 = pneg %p67
      %p74 = scmp.eq.s32.totalorder %s18, 1
      %p75 = por %p73, %p74
      %p76 = scmp.ne.s32.totalorder %s68, %s71
      %p77 = scmp.eq.s32.totalorder %s18, 0
      %p78 = por %p76, %p77
      %p79 = scmp.ne.s32.totalorder %s68, %s71
      %p80 = scmp.eq.s32.totalorder %s23, 1
      %p81 = por %p79, %p80
      %p82 = scmp.ne.s32.totalorder %s71, %s72
      %p83 = scmp.eq.s32.totalorder %s23, 0
      %p84 = por %p82, %p83
      %p85 = scmp.ne.s32.totalorder %s71, %s72
      %p86 = scmp.eq.s32.totalorder %s24, 1
      %p87 = por %p85, %p86
      %p89 = scmp.ne.s32.totalorder %s72, %s88
      %p90 = scmp.eq.s32.totalorder %s24, 0
      %p91 = por %p89, %p90
      %s92 = ssub.s32 %s25, %s37
      %s93 = ssub.s32 %s26, %s33
      %s94 = sor.u32 %s92, %s93
      %p95 = scmp.eq.s32.totalorder %s94, 0
      %s97 = sadd.s32 %s96, 1
      %s98 = scalar_select %p95, %s96, %s97
      %p101 = pneg %p95
      %p102 = scmp.eq.s32.totalorder %s18, 1
      %p103 = por %p101, %p102
      %p104 = scmp.ne.s32.totalorder %s96, %s99
      %p105 = scmp.eq.s32.totalorder %s18, 0
      %p106 = por %p104, %p105
      %p107 = scmp.ne.s32.totalorder %s96, %s99
      %p108 = scmp.eq.s32.totalorder %s23, 1
      %p109 = por %p107, %p108
      %p110 = scmp.ne.s32.totalorder %s99, %s100
      %p111 = scmp.eq.s32.totalorder %s23, 0
      %p112 = por %p110, %p111
      %p113 = scmp.ne.s32.totalorder %s99, %s100
      %p114 = scmp.eq.s32.totalorder %s24, 1
      %p115 = por %p113, %p114
      %p117 = scmp.ne.s32.totalorder %s100, %s116
      %p118 = scmp.eq.s32.totalorder %s24, 0
      %p119 = por %p117, %p118
      %s120 = ssub.s32 %s25, %s37
      %p121 = scmp.eq.s32.totalorder %s120, 0
      %s123 = sadd.s32 %s122, 1
      %s124 = scalar_select %p121, %s122, %s123
      %p127 = pneg %p121
      %p128 = scmp.eq.s32.totalorder %s18, 1
      %p129 = por %p127, %p128
      %p130 = scmp.ne.s32.totalorder %s122, %s125
      %p131 = scmp.eq.s32.totalorder %s18, 0
      %p132 = por %p130, %p131
      %p133 = scmp.ne.s32.totalorder %s122, %s125
      %p134 = scmp.eq.s32.totalorder %s23, 1
      %p135 = por %p133, %p134
      %p136 = scmp.ne.s32.totalorder %s125, %s126
      %p137 = scmp.eq.s32.totalorder %s23, 0
      %p138 = por %p136, %p137
      %p139 = scmp.ne.s32.totalorder %s125, %s126
      %p140 = scmp.eq.s32.totalorder %s24, 1
      %p141 = por %p139, %p140
      %p143 = scmp.ne.s32.totalorder %s126, %s142
      %p144 = scmp.eq.s32.totalorder %s24, 0
      %p145 = por %p143, %p144
      %s147 = sadd.s32 %s146, 1
      %p150 = scmp.eq.s32.totalorder %s18, 1
      %p151 = scmp.ne.s32.totalorder %s146, %s148
      %p152 = scmp.eq.s32.totalorder %s18, 0
      %p153 = por %p151, %p152
      %p154 = scmp.ne.s32.totalorder %s146, %s148
      %p155 = scmp.eq.s32.totalorder %s23, 1
      %p156 = por %p154, %p155
      %p157 = scmp.ne.s32.totalorder %s148, %s149
      %p158 = scmp.eq.s32.totalorder %s23, 0
      %p159 = por %p157, %p158
      %p160 = scmp.ne.s32.totalorder %s148, %s149
      %p161 = scmp.eq.s32.totalorder %s24, 1
      %p162 = por %p160, %p161
      %p164 = scmp.ne.s32.totalorder %s149, %s163
      %p165 = scmp.eq.s32.totalorder %s24, 0
      %p166 = por %p164, %p165
      %s168 = sadd.s32 %s167, 1
      %p171 = scmp.eq.s32.totalorder %s18, 1
      %p172 = scmp.ne.s32.totalorder %s167, %s169
      %p173 = scmp.eq.s32.totalorder %s18, 0
      %p174 = por %p172, %p173
      %p175 = scmp.ne.s32.totalorder %s167, %s169
      %p176 = scmp.eq.s32.totalorder %s23, 1
      %p177 = por %p175, %p176
      %p178 = scmp.ne.s32.totalorder %s169, %s170
      %p179 = scmp.eq.s32.totalorder %s23, 0
      %p180 = por %p178, %p179
      %p181 = scmp.ne.s32.totalorder %s169, %s170
      %p182 = scmp.eq.s32.totalorder %s24, 1
      %p183 = por %p181, %p182
      %p185 = scmp.ne.s32.totalorder %s170, %s184
      %p186 = scmp.eq.s32.totalorder %s24, 0
      %p187 = por %p185, %p186
      %s189 = sadd.s32 %s188, 1
      %p192 = scmp.eq.s32.totalorder %s18, 1
      %p193 = scmp.ne.s32.totalorder %s188, %s190
      %p194 = scmp.eq.s32.totalorder %s18, 0
      %p195 = por %p193, %p194
      %p196 = scmp.ne.s32.totalorder %s188, %s190
      %p197 = scmp.eq.s32.totalorder %s23, 1
      %p198 = por %p196, %p197
      %p199 = scmp.ne.s32.totalorder %s190, %s191
      %p200 = scmp.eq.s32.totalorder %s23, 0
      %p201 = por %p199, %p200
      %p202 = scmp.ne.s32.totalorder %s190, %s191
      %p203 = scmp.eq.s32.totalorder %s24, 1
      %p204 = por %p202, %p203
      %p206 = scmp.ne.s32.totalorder %s191, %s205
      %p207 = scmp.eq.s32.totalorder %s24, 0
      %p208 = por %p206, %p207
      %s210 = sadd.s32 %s209, 1
      %p213 = scmp.eq.s32.totalorder %s18, 1
      %p214 = scmp.ne.s32.totalorder %s209, %s211
      %p215 = scmp.eq.s32.totalorder %s18, 0
      %p216 = por %p214, %p215
      %p217 = scmp.ne.s32.totalorder %s209, %s211
      %p218 = scmp.eq.s32.totalorder %s23, 1
      %p219 = por %p217, %p218
      %p220 = scmp.ne.s32.totalorder %s211, %s212
      %p221 = scmp.eq.s32.totalorder %s23, 0
      %p222 = por %p220, %p221
      %p223 = scmp.ne.s32.totalorder %s211, %s212
      %p224 = scmp.eq.s32.totalorder %s24, 1
      %p225 = por %p223, %p224
      %p227 = scmp.ne.s32.totalorder %s212, %s226
      %p228 = scmp.eq.s32.totalorder %s24, 0
      %p229 = por %p227, %p228
      %s231 = sadd.s32 %s230, 1
      %p234 = scmp.eq.s32.totalorder %s18, 1
      %p235 = scmp.ne.s32.totalorder %s230, %s232
      %p236 = scmp.eq.s32.totalorder %s18, 0
      %p237 = por %p235, %p236
      %p238 = scmp.ne.s32.totalorder %s230, %s232
      %p239 = scmp.eq.s32.totalorder %s23, 1
      %p240 = por %p238, %p239
      %p241 = scmp.ne.s32.totalorder %s232, %s233
      %p242 = scmp.eq.s32.totalorder %s23, 0
      %p243 = por %p241, %p242
      %p244 = scmp.ne.s32.totalorder %s232, %s233
      %p245 = scmp.eq.s32.totalorder %s24, 1
      %p246 = por %p244, %p245
      %p248 = scmp.ne.s32.totalorder %s233, %s247
      %p249 = scmp.eq.s32.totalorder %s24, 0
      %p250 = por %p248, %p249
      %s251 = ssub.s32 %s25, %s37
      %s252 = ssub.s32 %s26, %s33
      %s253 = sor.u32 %s251, %s252
      %p254 = scmp.eq.s32.totalorder %s253, 0
      %s256 = sadd.s32 %s255, 1
      %s257 = scalar_select %p254, %s255, %s256
      %p260 = pneg %p254
      %p261 = scmp.eq.s32.totalorder %s18, 1
      %p262 = por %p260, %p261
      %p263 = scmp.ne.s32.totalorder %s255, %s258
      %p264 = scmp.eq.s32.totalorder %s18, 0
      %p265 = por %p263, %p264
      %p266 = scmp.ne.s32.totalorder %s255, %s258
      %p267 = scmp.eq.s32.totalorder %s23, 1
      %p268 = por %p266, %p267
      %p269 = scmp.ne.s32.totalorder %s258, %s259
      %p270 = scmp.eq.s32.totalorder %s23, 0
      %p271 = por %p269, %p270
      %p272 = scmp.ne.s32.totalorder %s258, %s259
      %p273 = scmp.eq.s32.totalorder %s24, 1
      %p274 = por %p272, %p273
      %p276 = scmp.ne.s32.totalorder %s259, %s275
      %p277 = scmp.eq.s32.totalorder %s24, 0
      %p278 = por %p276, %p277
      %p279 = scmp.le.s32.totalorder 1, %s18
      %p280 = scmp.lt.s32.totalorder %s18, 3
      %p281 = pnand %p279, %p280
      %p282 = pneg %p281
      // Predicated region
      $region9: #{tpu_custom_call.1} parent=5 // pred_check
        _
      $region10: #{tpu_custom_call.1} parent=5 // pred_check_branch
        %284 = sbr.rel (%p281) target = $region12
      $region11: #{tpu_custom_call.1} parent=5 // pred_region
        %s285 = ssub.s32 %s18, 1
        // Predicated region
        $region13: #{tpu_custom_call.1} parent=11 // pred_check
          %p286 = pneg %p159
        $region14: #{tpu_custom_call.1} parent=11 // pred_check_branch
          %288 = sbr.rel (%p286) target = $region16
        $region15: #{tpu_custom_call.1} parent=11 // pred_region
          _
        $region16: #{tpu_custom_call.1} parent=11 // pred_fallthru
          _
        // Predicated region
        $region17: #{tpu_custom_call.1} parent=11 // pred_check
          %p289 = pneg %p180
        $region18: #{tpu_custom_call.1} parent=11 // pred_check_branch
          %291 = sbr.rel (%p289) target = $region20
        $region19: #{tpu_custom_call.1} parent=11 // pred_region
          _
        $region20: #{tpu_custom_call.1} parent=11 // pred_fallthru
          _
        // Predicated region
        $region21: #{tpu_custom_call.1} parent=11 // pred_check
          %p292 = pneg %p201
        $region22: #{tpu_custom_call.1} parent=11 // pred_check_branch
          %294 = sbr.rel (%p292) target = $region24
        $region23: #{tpu_custom_call.1} parent=11 // pred_region
          _
        $region24: #{tpu_custom_call.1} parent=11 // pred_fallthru
          _
        // Predicated region
        $region25: #{tpu_custom_call.1} parent=11 // pred_check
          %p295 = pneg %p222
        $region26: #{tpu_custom_call.1} parent=11 // pred_check_branch
          %297 = sbr.rel (%p295) target = $region28
        $region27: #{tpu_custom_call.1} parent=11 // pred_region
          _
        $region28: #{tpu_custom_call.1} parent=11 // pred_fallthru
          _
        // Predicated region
        $region29: #{tpu_custom_call.1} parent=11 // pred_check
          %p298 = pneg %p243
        $region30: #{tpu_custom_call.1} parent=11 // pred_check_branch
          %300 = sbr.rel (%p298) target = $region32
        $region31: #{tpu_custom_call.1} parent=11 // pred_region
          _
        $region32: #{tpu_custom_call.1} parent=11 // pred_fallthru
          _
      $region12: #{tpu_custom_call.1} parent=5 // pred_fallthru
        _
      %p301 = scmp.lt.s32.totalorder %s18, 2
      // Predicated region
      $region33: #{tpu_custom_call.1} parent=5 // pred_check
        %p302 = pneg %p301
      $region34: #{tpu_custom_call.1} parent=5 // pred_check_branch
        %304 = sbr.rel (%p302) target = $region36
      $region35: #{tpu_custom_call.1} parent=5 // pred_region
        // Predicated region
        $region37: #{tpu_custom_call.1} parent=35 // pred_check
          %p305 = pneg %p52
        $region38: #{tpu_custom_call.1} parent=35 // pred_check_branch
          %307 = sbr.rel (%p305) target = $region40
        $region39: #{tpu_custom_call.1} parent=35 // pred_region
          %p308 = scmp.lt.s32.totalorder %s25, 1
          %s309 = scalar_select %p308, %s25, 1
          %p310 = scmp.lt.s32.totalorder %s26, 0
          %s311 = scalar_select %p310, %s26, 0
          %s312 = sadd.s32 %s311, %s309
          %s313 = smul.addr %s312, 4
          %s314 = scalar_lea.vmem %s0, %s313
        $region40: #{tpu_custom_call.1} parent=35 // pred_fallthru
          _
        // Predicated region
        $region41: #{tpu_custom_call.1} parent=35 // pred_check
          %p315 = pneg %p78
        $region42: #{tpu_custom_call.1} parent=35 // pred_check_branch
          %317 = sbr.rel (%p315) target = $region44
        $region43: #{tpu_custom_call.1} parent=35 // pred_region
          %p318 = scmp.lt.s32.totalorder %s25, 1
          %s319 = scalar_select %p318, %s25, 1
          %s320 = smul.addr %s319, 8
          %s321 = scalar_lea.vmem %s1, %s320
        $region44: #{tpu_custom_call.1} parent=35 // pred_fallthru
          _
        // Predicated region
        $region45: #{tpu_custom_call.1} parent=35 // pred_check
          %p322 = pneg %p106
        $region46: #{tpu_custom_call.1} parent=35 // pred_check_branch
          %324 = sbr.rel (%p322) target = $region48
        $region47: #{tpu_custom_call.1} parent=35 // pred_region
          %p325 = scmp.lt.s32.totalorder %s25, 1
          %s326 = scalar_select %p325, %s25, 1
          %p327 = scmp.lt.s32.totalorder %s26, 0
          %s328 = scalar_select %p327, %s26, 0
          %s329 = sadd.s32 %s328, %s326
          %s330 = smul.addr %s329, 8
          %s331 = scalar_lea.vmem %s2, %s330
        $region48: #{tpu_custom_call.1} parent=35 // pred_fallthru
          _
        // Predicated region
        $region49: #{tpu_custom_call.1} parent=35 // pred_check
          %p332 = pneg %p132
        $region50: #{tpu_custom_call.1} parent=35 // pred_check_branch
          %334 = sbr.rel (%p332) target = $region52
        $region51: #{tpu_custom_call.1} parent=35 // pred_region
          %p335 = scmp.lt.s32.totalorder %s25, 1
          %s336 = scalar_select %p335, %s25, 1
          %s337 = smul.addr %s336, 8
          %s338 = scalar_lea.vmem %s3, %s337
        $region52: #{tpu_custom_call.1} parent=35 // pred_fallthru
          _
      $region36: #{tpu_custom_call.1} parent=5 // pred_fallthru
        _
      %p339 = scmp.le.s32.totalorder 1, %s18
      %p340 = scmp.lt.s32.totalorder %s18, 3
      %p341 = pnand %p339, %p340
      %p342 = pneg %p341
      // Predicated region
      $region53: #{tpu_custom_call.1} parent=5 // pred_check
        _
      $region54: #{tpu_custom_call.1} parent=5 // pred_check_branch
        %344 = sbr.rel (%p341) target = $region56
      $region55: #{tpu_custom_call.1} parent=5 // pred_region
        %s345 = ssub.s32 %s18, 1
        %p346 = scmp.lt.s32.totalorder %s27, 1
        %s347 = scalar_select %p346, %s27, 1
        %p348 = scmp.lt.s32.totalorder %s28, 0
        %s349 = scalar_select %p348, %s28, 0
        %s350 = sadd.s32 %s349, %s347
        %s351 = smul.addr %s350, 4
        %s352 = scalar_lea.vmem %s0, %s351
        %p353 = pneg %p58
        %p354 = pneg %p55
        %p355 = scmp.lt.s32.totalorder %s27, 1
        %s356 = scalar_select %p355, %s27, 1
        %s357 = smul.addr %s356, 8
        %s358 = scalar_lea.vmem %s1, %s357
        %p359 = pneg %p84
        %p360 = pneg %p81
        %p361 = scmp.lt.s32.totalorder %s27, 1
        %s362 = scalar_select %p361, %s27, 1
        %p363 = scmp.lt.s32.totalorder %s28, 0
        %s364 = scalar_select %p363, %s28, 0
        %s365 = sadd.s32 %s364, %s362
        %s366 = smul.addr %s365, 8
        %s367 = scalar_lea.vmem %s2, %s366
        %p368 = pneg %p112
        %p369 = pneg %p109
        %p370 = scmp.lt.s32.totalorder %s27, 1
        %s371 = scalar_select %p370, %s27, 1
        %s372 = smul.addr %s371, 8
        %s373 = scalar_lea.vmem %s3, %s372
        %p374 = pneg %p138
        %p375 = pneg %p135
        %p376 = pneg %p159
        %p377 = pneg %p156
        %p378 = pneg %p180
        %p379 = pneg %p177
        %p380 = pneg %p201
        %p381 = pneg %p198
        %p382 = pneg %p222
        %p383 = pneg %p219
        %p384 = pneg %p243
        %p385 = pneg %p240
        %p386 = pneg %p271
        %p387 = pneg %p268
        %s388 = sand.u32 %s258, 1
        %s389 = scalar_lea.sflag [#allocation3], %s388
        %s390 = sand.u32 %s258, 1
        %s391 = smul.addr %s390, 16
        %s392 = scalar_lea.vmem [#allocation2], %s391
        %p393 = scmp.lt.s32.totalorder %s27, 1
        %s394 = scalar_select %p393, %s27, 1
        %p395 = scmp.lt.s32.totalorder %s28, 0
        %s396 = scalar_select %p395, %s28, 0
        %s397 = sadd.s32 %s396, %s394
        %s398 = smul.addr %s397, 4
        %s399 = scalar_lea.vmem %s0, %s398
        %p400 = scmp.lt.s32.totalorder %s27, 1
        %s401 = scalar_select %p400, %s27, 1
        %s402 = smul.addr %s401, 8
        %s403 = scalar_lea.vmem %s1, %s402
        %p404 = scmp.lt.s32.totalorder %s27, 1
        %s405 = scalar_select %p404, %s27, 1
        %p406 = scmp.lt.s32.totalorder %s28, 0
        %s407 = scalar_select %p406, %s28, 0
        %s408 = sadd.s32 %s407, %s405
        %s409 = smul.addr %s408, 8
        %s410 = scalar_lea.vmem %s2, %s409
        %p411 = scmp.lt.s32.totalorder %s27, 1
        %s412 = scalar_select %p411, %s27, 1
        %s413 = smul.addr %s412, 8
        %s414 = scalar_lea.vmem %s3, %s413
        %v415 = vld [vmem:[%s399] sm:$0x7]
        %v416 = vld [vmem:[%s403] sm:$0xff]
        %v417 = vmul.f32 %v415, %v415
        %vm418 = vcmask 124928
        %v419 = vsel %vm418, %v417, 0.0
        %v420 = vrot.slane %v419, 4
        %v421 = vadd.f32 %v419, %v420
        %v422 = vrot.slane %v421, 2
        %v423 = vadd.f32 %v421, %v422
        %v424 = vrot.slane %v423, 1
        %v425 = vadd.f32 %v423, %v424
        %v426 = vmul.f32 %v416, %v416
        %vm427 = vcmask 23552
        %v428 = vsel %vm427, %v426, 0.0
        %429 = vadd.xlane.f32.xlu0 %v428
        %v430 = vpop.xlane.xlu0 %429
        %v432 = vsel %vm427, %v416, 0
        %vm434 = vcmask 1042432
        %v436 = vsel %vm434, %v415, 0
        %438 = vmatprep.subr.mxu0 0.0
        %439 = vmatpush1.msra.mxu0 %v436
        %440 = vmatprep.subr.mxu0 0.0
        %441 = vmatpush1.msra.mxu0 0.0
        %442 = vmatprep.subr.mxu0 0.0
        %443 = vmatpush1.msra.mxu0 0.0
        %444 = vmatprep.subr.mxu0 0.0
        %445 = vmatpush1.msra.mxu0 0.0
        %446 = vmatprep.subr.mxu0 0.0
        %447 = vmatpush1.msra.mxu0 0.0
        %448 = vmatprep.subr.mxu0 0.0
        %449 = vmatpush1.msra.mxu0 0.0
        %450 = vmatprep.subr.mxu0 0.0
        %451 = vmatpush1.msra.mxu0 0.0
        %452 = vmatprep.subr.mxu0 0.0
        %453 = vmatpush1.msra.mxu0 0.0
        %454 = vmatprep.subr.mxu0 0.0
        %455 = vmatpush1.msra.mxu0 0.0
        %456 = vmatprep.subr.mxu0 0.0
        %457 = vmatpush1.msra.mxu0 0.0
        %458 = vmatprep.subr.mxu0 0.0
        %459 = vmatpush1.msra.mxu0 0.0
        %460 = vmatprep.subr.mxu0 0.0
        %461 = vmatpush1.msra.mxu0 0.0
        %462 = vmatprep.subr.mxu0 0.0
        %463 = vmatpush1.msra.mxu0 0.0
        %464 = vmatprep.subr.mxu0 0.0
        %465 = vmatpush1.msra.mxu0 0.0
        %466 = vmatprep.subr.mxu0 0.0
        %467 = vmatpush1.msra.mxu0 0.0
        %468 = vmatprep.subr.mxu0 0.0
        %469 = vmatpush1.msra.mxu0 0.0
        %470 = vmatprep.subr.mxu0 0.0
        %471 = vmatpush1.msra.mxu0 0.0
        %472 = vmatprep.subr.mxu0 0.0
        %473 = vmatpush1.msra.mxu0 0.0
        %474 = vmatprep.subr.mxu0 0.0
        %475 = vmatpush1.msra.mxu0 0.0
        %476 = vmatprep.subr.mxu0 0.0
        %477 = vmatpush1.msra.mxu0 0.0
        %478 = vmatprep.subr.mxu0 0.0
        %479 = vmatpush1.msra.mxu0 0.0
        %480 = vmatprep.subr.mxu0 0.0
        %481 = vmatpush1.msra.mxu0 0.0
        %482 = vmatprep.subr.mxu0 0.0
        %483 = vmatpush1.msra.mxu0 0.0
        %484 = vmatprep.subr.mxu0 0.0
        %485 = vmatpush1.msra.mxu0 0.0
        %486 = vmatprep.subr.mxu0 0.0
        %487 = vmatpush1.msra.mxu0 0.0
        %488 = vmatprep.subr.mxu0 0.0
        %489 = vmatpush1.msra.mxu0 0.0
        %490 = vmatprep.subr.mxu0 0.0
        %491 = vmatpush1.msra.mxu0 0.0
        %492 = vmatprep.subr.mxu0 0.0
        %493 = vmatpush1.msra.mxu0 0.0
        %494 = vmatprep.subr.mxu0 0.0
        %495 = vmatpush1.msra.mxu0 0.0
        %496 = vmatprep.subr.mxu0 0.0
        %497 = vmatpush1.msra.mxu0 0.0
        %498 = vmatprep.subr.mxu0 0.0
        %499 = vmatpush1.msra.mxu0 0.0
        %500 = vmatprep.subr.mxu0 0.0
        %501 = vmatpush1.msra.mxu0 0.0
        %502 = vmatprep.mubr.f32.mxu0 0.0
        %503 = vmatmul.mubr.f32.gmra.mrb[0].mxu0 %v432
        %v504 = vpop.f32.mrb[0].mxu0
        %v505 = vadd.f32 0.0, %v504
        %v506 = vpop.f32.mrb[0].mxu0
        %507 = vdwg.mxu0
        %v508 = vadd.f32 %v430, %v425
        %v509 = vmul.f32 %v505, 2.0
        %v510 = vsub.f32 %v508, %v509
        %v511 = vmax.f32 %v510, 0.0
        %v512 = vlaneseq
        %v513 = vshrl.u32 %v512, 7
        %v515 = vand.u32 %v511, 4294967288
        %v516 = vor.u32 %v515, %v513
        %vm517 = vcmask 130048
        %v518 = vsel %vm517, %v516, 2147483647
        %v519 = vrot.slane %v518, 4
        %vm520 = vcmp.lt.s32.totalorder %v518, %v519
        %v521 = vsel %vm520, %v518, %v519
        %v522 = vrot.slane %v521, 2
        %vm523 = vcmp.lt.s32.totalorder %v521, %v522
        %v524 = vsel %vm523, %v521, %v522
        %v525 = vrot.slane %v524, 1
        %vm526 = vcmp.lt.s32.totalorder %v524, %v525
        %v527 = vsel %vm526, %v524, %v525
        %v528 = vand.u32 %v527, 7
        %vm529 = vcmp.eq.s32.totalorder %v513, %v528
        %v530 = vsel %vm529, 2147483647, %v516
        %v531 = vsel %vm517, %v530, 2147483647
        %v532 = vrot.slane %v531, 4
        %vm533 = vcmp.lt.s32.totalorder %v531, %v532
        %v534 = vsel %vm533, %v531, %v532
        %v535 = vrot.slane %v534, 2
        %vm536 = vcmp.lt.s32.totalorder %v534, %v535
        %v537 = vsel %vm536, %v534, %v535
        %v538 = vrot.slane %v537, 1
        %vm539 = vcmp.lt.s32.totalorder %v537, %v538
        %v540 = vsel %vm539, %v537, %v538
        %v541 = vand.u32 %v540, 7
        %vm542 = vcmp.eq.s32.totalorder %v513, %v541
        %vm543 = vmor %vm529, %vm542
        %v544 = vsel %vm542, 2147483647, %v530
        %v545 = vsel %vm517, %v544, 2147483647
        %v546 = vrot.slane %v545, 4
        %vm547 = vcmp.lt.s32.totalorder %v545, %v546
        %v548 = vsel %vm547, %v545, %v546
        %v549 = vrot.slane %v548, 2
        %vm550 = vcmp.lt.s32.totalorder %v548, %v549
        %v551 = vsel %vm550, %v548, %v549
        %v552 = vrot.slane %v551, 1
        %vm553 = vcmp.lt.s32.totalorder %v551, %v552
        %v554 = vsel %vm553, %v551, %v552
        %v555 = vand.u32 %v554, 7
        %vm556 = vcmp.eq.s32.totalorder %v513, %v555
        %vm557 = vmor %vm543, %vm556
        %v558 = vsel %vm557, 1, 0
        %v559 = vcvt.s32.f32 %v558
        %v560 = vmax.f32 %v511, 1e-08
        %v561 = vrcp.pop %v560
        %v562 = vmul.f32 %v559, %v561
        %v563 = vsel %vm517, %v562, 0.0
        %v564 = vrot.slane %v563, 4
        %v565 = vadd.f32 %v563, %v564
        %v566 = vrot.slane %v565, 2
        %v567 = vadd.f32 %v565, %v566
        %v568 = vrot.slane %v567, 1
        %v569 = vadd.f32 %v567, %v568
        %v570 = vrcp.pop %v569
        %v571 = vmul.f32 %v562, %v570
        %v572 = vld [vmem:[%s414] sm:$0xff]
        %vm573 = vcmask 64512
        %v575 = vsel %vm573, %v572, 0
        %577 = vmatprep.subr.mxu0 0.0
        %578 = vmatpush1.msra.mxu0 %v571
        %579 = vmatprep.subr.mxu0 0.0
        %580 = vmatpush1.msra.mxu0 0.0
        %581 = vmatprep.subr.mxu0 0.0
        %582 = vmatpush1.msra.mxu0 0.0
        %583 = vmatprep.subr.mxu0 0.0
        %584 = vmatpush1.msra.mxu0 0.0
        %585 = vmatprep.subr.mxu0 0.0
        %586 = vmatpush1.msra.mxu0 0.0
        %587 = vmatprep.subr.mxu0 0.0
        %588 = vmatpush1.msra.mxu0 0.0
        %589 = vmatprep.subr.mxu0 0.0
        %590 = vmatpush1.msra.mxu0 0.0
        %591 = vmatprep.subr.mxu0 0.0
        %592 = vmatpush1.msra.mxu0 0.0
        %593 = vmatprep.subr.mxu0 0.0
        %594 = vmatpush1.msra.mxu0 0.0
        %595 = vmatprep.subr.mxu0 0.0
        %596 = vmatpush1.msra.mxu0 0.0
        %597 = vmatprep.subr.mxu0 0.0
        %598 = vmatpush1.msra.mxu0 0.0
        %599 = vmatprep.subr.mxu0 0.0
        %600 = vmatpush1.msra.mxu0 0.0
        %601 = vmatprep.subr.mxu0 0.0
        %602 = vmatpush1.msra.mxu0 0.0
        %603 = vmatprep.subr.mxu0 0.0
        %604 = vmatpush1.msra.mxu0 0.0
        %605 = vmatprep.subr.mxu0 0.0
        %606 = vmatpush1.msra.mxu0 0.0
        %607 = vmatprep.subr.mxu0 0.0
        %608 = vmatpush1.msra.mxu0 0.0
        %609 = vmatprep.subr.mxu0 0.0
        %610 = vmatpush1.msra.mxu0 0.0
        %611 = vmatprep.subr.mxu0 0.0
        %612 = vmatpush1.msra.mxu0 0.0
        %613 = vmatprep.subr.mxu0 0.0
        %614 = vmatpush1.msra.mxu0 0.0
        %615 = vmatprep.subr.mxu0 0.0
        %616 = vmatpush1.msra.mxu0 0.0
        %617 = vmatprep.subr.mxu0 0.0
        %618 = vmatpush1.msra.mxu0 0.0
        %619 = vmatprep.subr.mxu0 0.0
        %620 = vmatpush1.msra.mxu0 0.0
        %621 = vmatprep.subr.mxu0 0.0
        %622 = vmatpush1.msra.mxu0 0.0
        %623 = vmatprep.subr.mxu0 0.0
        %624 = vmatpush1.msra.mxu0 0.0
        %625 = vmatprep.subr.mxu0 0.0
        %626 = vmatpush1.msra.mxu0 0.0
        %627 = vmatprep.subr.mxu0 0.0
        %628 = vmatpush1.msra.mxu0 0.0
        %629 = vmatprep.subr.mxu0 0.0
        %630 = vmatpush1.msra.mxu0 0.0
        %631 = vmatprep.subr.mxu0 0.0
        %632 = vmatpush1.msra.mxu0 0.0
        %633 = vmatprep.subr.mxu0 0.0
        %634 = vmatpush1.msra.mxu0 0.0
        %635 = vmatprep.subr.mxu0 0.0
        %636 = vmatpush1.msra.mxu0 0.0
        %637 = vmatprep.subr.mxu0 0.0
        %638 = vmatpush1.msra.mxu0 0.0
        %639 = vmatprep.subr.mxu0 0.0
        %640 = vmatpush1.msra.mxu0 0.0
        %641 = vmatprep.mubr.f32.mxu0 0.0
        %642 = vmatmul.mubr.f32.gmra.mrb[0].mxu0 %v575
        %v643 = vpop.f32.mrb[0].mxu0
        %v644 = vadd.f32 0.0, %v643
        %v645 = vpop.f32.mrb[0].mxu0
        %646 = vdwg.mxu0
        %v647 = vld [vmem:[%s4] sm:$0xff]
        %v648 = vld [vmem:[%s4 + $0x8] sm:$0xff]
        %v649 = vld [vmem:[%s4 + $0x10] sm:$0xff]
        %v650 = vld [vmem:[%s4 + $0x18] sm:$0xff]
        %v651 = vld [vmem:[%s410] sm:$0xff]
        %v652 = vld [vmem:[%s5] sm:$0xff]
        %v653 = vld [vmem:[%s5 + $0x8] sm:$0xff]
        %v654 = vld [vmem:[%s5 + $0x10] sm:$0xff]
        %v655 = vld [vmem:[%s5 + $0x18] sm:$0xff]
        %v657 = vsel %vm573, %v652, 0
        %v660 = vsel %vm573, %v653, 0
        %v663 = vsel %vm573, %v654, 0
        %v666 = vsel %vm573, %v655, 0
        %668 = vmatprep.subr.mxu0 0.0
        %669 = vmatpush1.msra.mxu0 %v644
        %670 = vmatprep.subr.mxu0 0.0
        %671 = vmatpush1.msra.mxu0 0.0
        %672 = vmatprep.subr.mxu0 0.0
        %673 = vmatpush1.msra.mxu0 0.0
        %674 = vmatprep.subr.mxu0 0.0
        %675 = vmatpush1.msra.mxu0 0.0
        %676 = vmatprep.subr.mxu0 0.0
        %677 = vmatpush1.msra.mxu0 0.0
        %678 = vmatprep.subr.mxu0 0.0
        %679 = vmatpush1.msra.mxu0 0.0
        %680 = vmatprep.subr.mxu0 0.0
        %681 = vmatpush1.msra.mxu0 0.0
        %682 = vmatprep.subr.mxu0 0.0
        %683 = vmatpush1.msra.mxu0 0.0
        %684 = vmatprep.subr.mxu0 0.0
        %685 = vmatpush1.msra.mxu0 0.0
        %686 = vmatprep.subr.mxu0 0.0
        %687 = vmatpush1.msra.mxu0 0.0
        %688 = vmatprep.subr.mxu0 0.0
        %689 = vmatpush1.msra.mxu0 0.0
        %690 = vmatprep.subr.mxu0 0.0
        %691 = vmatpush1.msra.mxu0 0.0
        %692 = vmatprep.subr.mxu0 0.0
        %693 = vmatpush1.msra.mxu0 0.0
        %694 = vmatprep.subr.mxu0 0.0
        %695 = vmatpush1.msra.mxu0 0.0
        %696 = vmatprep.subr.mxu0 0.0
        %697 = vmatpush1.msra.mxu0 0.0
        %698 = vmatprep.subr.mxu0 0.0
        %699 = vmatpush1.msra.mxu0 0.0
        %700 = vmatprep.subr.mxu0 0.0
        %701 = vmatpush1.msra.mxu0 0.0
        %702 = vmatprep.subr.mxu0 0.0
        %703 = vmatpush1.msra.mxu0 0.0
        %704 = vmatprep.subr.mxu0 0.0
        %705 = vmatpush1.msra.mxu0 0.0
        %706 = vmatprep.subr.mxu0 0.0
        %707 = vmatpush1.msra.mxu0 0.0
        %708 = vmatprep.subr.mxu0 0.0
        %709 = vmatpush1.msra.mxu0 0.0
        %710 = vmatprep.subr.mxu0 0.0
        %711 = vmatpush1.msra.mxu0 0.0
        %712 = vmatprep.subr.mxu0 0.0
        %713 = vmatpush1.msra.mxu0 0.0
        %714 = vmatprep.subr.mxu0 0.0
        %715 = vmatpush1.msra.mxu0 0.0
        %716 = vmatprep.subr.mxu0 0.0
        %717 = vmatpush1.msra.mxu0 0.0
        %718 = vmatprep.subr.mxu0 0.0
        %719 = vmatpush1.msra.mxu0 0.0
        %720 = vmatprep.subr.mxu0 0.0
        %721 = vmatpush1.msra.mxu0 0.0
        %722 = vmatprep.subr.mxu0 0.0
        %723 = vmatpush1.msra.mxu0 0.0
        %724 = vmatprep.subr.mxu0 0.0
        %725 = vmatpush1.msra.mxu0 0.0
        %726 = vmatprep.subr.mxu0 0.0
        %727 = vmatpush1.msra.mxu0 0.0
        %728 = vmatprep.subr.mxu0 0.0
        %729 = vmatpush1.msra.mxu0 0.0
        %730 = vmatprep.subr.mxu0 0.0
        %731 = vmatpush1.msra.mxu0 0.0
        %732 = vmatprep.mubr.f32.mxu0 0.0
        %733 = vmatmul.mubr.f32.gmra.mrb[0].mxu0 %v657
        %v734 = vpop.f32.mrb[0].mxu0
        %v735 = vadd.f32 0.0, %v734
        %v736 = vpop.f32.mrb[0].mxu0
        %737 = vmatprep.mubr.f32.mxu0 0.0
        %738 = vmatmul.mubr.f32.gmra.mrb[0].mxu0 %v660
        %v739 = vpop.f32.mrb[0].mxu0
        %v740 = vadd.f32 0.0, %v739
        %v741 = vpop.f32.mrb[0].mxu0
        %742 = vmatprep.mubr.f32.mxu0 0.0
        %743 = vmatmul.mubr.f32.gmra.mrb[0].mxu0 %v663
        %v744 = vpop.f32.mrb[0].mxu0
        %v745 = vadd.f32 0.0, %v744
        %v746 = vpop.f32.mrb[0].mxu0
        %747 = vmatprep.mubr.f32.mxu0 0.0
        %748 = vmatmul.mubr.f32.gmra.mrb[0].mxu0 %v666
        %v749 = vpop.f32.mrb[0].mxu0
        %v750 = vadd.f32 0.0, %v749
        %v751 = vpop.f32.mrb[0].mxu0
        %752 = vdwg.mxu0
        %v754 = vsel %vm573, %v647, 0
        %v757 = vsel %vm573, %v648, 0
        %v760 = vsel %vm573, %v649, 0
        %v763 = vsel %vm573, %v650, 0
        %765 = vmatprep.subr.mxu0 0.0
        %766 = vmatpush1.msra.mxu0 %v651
        %767 = vmatprep.subr.mxu0 0.0
        %768 = vmatpush1.msra.mxu0 0.0
        %769 = vmatprep.subr.mxu0 0.0
        %770 = vmatpush1.msra.mxu0 0.0
        %771 = vmatprep.subr.mxu0 0.0
        %772 = vmatpush1.msra.mxu0 0.0
        %773 = vmatprep.subr.mxu0 0.0
        %774 = vmatpush1.msra.mxu0 0.0
        %775 = vmatprep.subr.mxu0 0.0
        %776 = vmatpush1.msra.mxu0 0.0
        %777 = vmatprep.subr.mxu0 0.0
        %778 = vmatpush1.msra.mxu0 0.0
        %779 = vmatprep.subr.mxu0 0.0
        %780 = vmatpush1.msra.mxu0 0.0
        %781 = vmatprep.subr.mxu0 0.0
        %782 = vmatpush1.msra.mxu0 0.0
        %783 = vmatprep.subr.mxu0 0.0
        %784 = vmatpush1.msra.mxu0 0.0
        %785 = vmatprep.subr.mxu0 0.0
        %786 = vmatpush1.msra.mxu0 0.0
        %787 = vmatprep.subr.mxu0 0.0
        %788 = vmatpush1.msra.mxu0 0.0
        %789 = vmatprep.subr.mxu0 0.0
        %790 = vmatpush1.msra.mxu0 0.0
        %791 = vmatprep.subr.mxu0 0.0
        %792 = vmatpush1.msra.mxu0 0.0
        %793 = vmatprep.subr.mxu0 0.0
        %794 = vmatpush1.msra.mxu0 0.0
        %795 = vmatprep.subr.mxu0 0.0
        %796 = vmatpush1.msra.mxu0 0.0
        %797 = vmatprep.subr.mxu0 0.0
        %798 = vmatpush1.msra.mxu0 0.0
        %799 = vmatprep.subr.mxu0 0.0
        %800 = vmatpush1.msra.mxu0 0.0
        %801 = vmatprep.subr.mxu0 0.0
        %802 = vmatpush1.msra.mxu0 0.0
        %803 = vmatprep.subr.mxu0 0.0
        %804 = vmatpush1.msra.mxu0 0.0
        %805 = vmatprep.subr.mxu0 0.0
        %806 = vmatpush1.msra.mxu0 0.0
        %807 = vmatprep.subr.mxu0 0.0
        %808 = vmatpush1.msra.mxu0 0.0
        %809 = vmatprep.subr.mxu0 0.0
        %810 = vmatpush1.msra.mxu0 0.0
        %811 = vmatprep.subr.mxu0 0.0
        %812 = vmatpush1.msra.mxu0 0.0
        %813 = vmatprep.subr.mxu0 0.0
        %814 = vmatpush1.msra.mxu0 0.0
        %815 = vmatprep.subr.mxu0 0.0
        %816 = vmatpush1.msra.mxu0 0.0
        %817 = vmatprep.subr.mxu0 0.0
        %818 = vmatpush1.msra.mxu0 0.0
        %819 = vmatprep.subr.mxu0 0.0
        %820 = vmatpush1.msra.mxu0 0.0
        %821 = vmatprep.subr.mxu0 0.0
        %822 = vmatpush1.msra.mxu0 0.0
        %823 = vmatprep.subr.mxu0 0.0
        %824 = vmatpush1.msra.mxu0 0.0
        %825 = vmatprep.subr.mxu0 0.0
        %826 = vmatpush1.msra.mxu0 0.0
        %827 = vmatprep.subr.mxu0 0.0
        %828 = vmatpush1.msra.mxu0 0.0
        %829 = vmatprep.mubr.f32.mxu0 0.0
        %830 = vmatmul.mubr.f32.gmra.mrb[0].mxu0 %v754
        %v831 = vpop.f32.mrb[0].mxu0
        %v832 = vadd.f32 %v735, %v831
        %v833 = vpop.f32.mrb[0].mxu0
        %834 = vmatprep.mubr.f32.mxu0 0.0
        %835 = vmatmul.mubr.f32.gmra.mrb[0].mxu0 %v757
        %v836 = vpop.f32.mrb[0].mxu0
        %v837 = vadd.f32 %v740, %v836
        %v838 = vpop.f32.mrb[0].mxu0
        %839 = vmatprep.mubr.f32.mxu0 0.0
        %840 = vmatmul.mubr.f32.gmra.mrb[0].mxu0 %v760
        %v841 = vpop.f32.mrb[0].mxu0
        %v842 = vadd.f32 %v745, %v841
        %v843 = vpop.f32.mrb[0].mxu0
        %844 = vmatprep.mubr.f32.mxu0 0.0
        %845 = vmatmul.mubr.f32.gmra.mrb[0].mxu0 %v763
        %v846 = vpop.f32.mrb[0].mxu0
        %v847 = vadd.f32 %v750, %v846
        %v848 = vpop.f32.mrb[0].mxu0
        %849 = vdwg.mxu0
        %v850 = vld [vmem:[%s6] sm:$0xff]
        %v851 = vld [vmem:[%s6 + $0x8] sm:$0xff]
        %v852 = vld [vmem:[%s6 + $0x10] sm:$0xff]
        %v853 = vld [vmem:[%s6 + $0x18] sm:$0xff]
        %855 = vset.pattern.permute.xlu0 0
        %856 = vperm.xlu0 %855, %v850
        %v857 = vpop.permute.xlu0 %856
        %860 = vset.pattern.permute.xlu0 0
        %861 = vperm.xlu0 %860, %v851
        %v862 = vpop.permute.xlu0 %861
        %865 = vset.pattern.permute.xlu0 0
        %866 = vperm.xlu0 %865, %v852
        %v867 = vpop.permute.xlu0 %866
        %870 = vset.pattern.permute.xlu0 0
        %871 = vperm.xlu0 %870, %v853
        %v872 = vpop.permute.xlu0 %871
        %v874 = vadd.f32 %v832, %v857
        %v875 = vadd.f32 %v837, %v862
        %v876 = vadd.f32 %v842, %v867
        %v877 = vadd.f32 %v847, %v872
        %v878 = vmax.f32 %v874, 0.0
        %v879 = vmax.f32 %v875, 0.0
        %v880 = vmax.f32 %v876, 0.0
        %v881 = vmax.f32 %v877, 0.0
        %v882 = vld [vmem:[%s7] sm:$0xff]
        %v883 = vld [vmem:[%s7 + $0x8] sm:$0xff]
        %v884 = vld [vmem:[%s8] sm:$0xff]
        %v885 = vld [vmem:[%s8 + $0x8] sm:$0xff]
        %887 = vset.pattern.permute.xlu0 0
        %888 = vperm.xlu0 %887, %v884
        %v889 = vpop.permute.xlu0 %888
        %892 = vset.pattern.permute.xlu0 0
        %893 = vperm.xlu0 %892, %v885
        %v894 = vpop.permute.xlu0 %893
        %vm896 = vcmask 261120
        %v898 = vsel %vm896, %v882, 0
        %v901 = vsel %vm896, %v883, 0
        %903 = vmatprep.subr.mxu0 0.0
        %904 = vmatpush1.msra.mxu0 %v878
        %905 = vmatprep.subr.mxu0 0.0
        %906 = vmatpush1.msra.mxu0 %v879
        %907 = vmatprep.subr.mxu0 0.0
        %908 = vmatpush1.msra.mxu0 %v880
        %909 = vmatprep.subr.mxu0 0.0
        %910 = vmatpush1.msra.mxu0 %v881
        %911 = vmatprep.subr.mxu0 0.0
        %912 = vmatpush1.msra.mxu0 0.0
        %913 = vmatprep.subr.mxu0 0.0
        %914 = vmatpush1.msra.mxu0 0.0
        %915 = vmatprep.subr.mxu0 0.0
        %916 = vmatpush1.msra.mxu0 0.0
        %917 = vmatprep.subr.mxu0 0.0
        %918 = vmatpush1.msra.mxu0 0.0
        %919 = vmatprep.subr.mxu0 0.0
        %920 = vmatpush1.msra.mxu0 0.0
        %921 = vmatprep.subr.mxu0 0.0
        %922 = vmatpush1.msra.mxu0 0.0
        %923 = vmatprep.subr.mxu0 0.0
        %924 = vmatpush1.msra.mxu0 0.0
        %925 = vmatprep.subr.mxu0 0.0
        %926 = vmatpush1.msra.mxu0 0.0
        %927 = vmatprep.subr.mxu0 0.0
        %928 = vmatpush1.msra.mxu0 0.0
        %929 = vmatprep.subr.mxu0 0.0
        %930 = vmatpush1.msra.mxu0 0.0
        %931 = vmatprep.subr.mxu0 0.0
        %932 = vmatpush1.msra.mxu0 0.0
        %933 = vmatprep.subr.mxu0 0.0
        %934 = vmatpush1.msra.mxu0 0.0
        %935 = vmatprep.subr.mxu0 0.0
        %936 = vmatpush1.msra.mxu0 0.0
        %937 = vmatprep.subr.mxu0 0.0
        %938 = vmatpush1.msra.mxu0 0.0
        %939 = vmatprep.subr.mxu0 0.0
        %940 = vmatpush1.msra.mxu0 0.0
        %941 = vmatprep.subr.mxu0 0.0
        %942 = vmatpush1.msra.mxu0 0.0
        %943 = vmatprep.subr.mxu0 0.0
        %944 = vmatpush1.msra.mxu0 0.0
        %945 = vmatprep.subr.mxu0 0.0
        %946 = vmatpush1.msra.mxu0 0.0
        %947 = vmatprep.subr.mxu0 0.0
        %948 = vmatpush1.msra.mxu0 0.0
        %949 = vmatprep.subr.mxu0 0.0
        %950 = vmatpush1.msra.mxu0 0.0
        %951 = vmatprep.subr.mxu0 0.0
        %952 = vmatpush1.msra.mxu0 0.0
        %953 = vmatprep.subr.mxu0 0.0
        %954 = vmatpush1.msra.mxu0 0.0
        %955 = vmatprep.subr.mxu0 0.0
        %956 = vmatpush1.msra.mxu0 0.0
        %957 = vmatprep.subr.mxu0 0.0
        %958 = vmatpush1.msra.mxu0 0.0
        %959 = vmatprep.subr.mxu0 0.0
        %960 = vmatpush1.msra.mxu0 0.0
        %961 = vmatprep.subr.mxu0 0.0
        %962 = vmatpush1.msra.mxu0 0.0
        %963 = vmatprep.subr.mxu0 0.0
        %964 = vmatpush1.msra.mxu0 0.0
        %965 = vmatprep.subr.mxu0 0.0
        %966 = vmatpush1.msra.mxu0 0.0
        %967 = vmatprep.mubr.f32.mxu0 0.0
        %968 = vmatmul.mubr.f32.gmra.mrb[0].mxu0 %v898
        %v969 = vpop.f32.mrb[0].mxu0
        %v970 = vadd.f32 %v889, %v969
        %v971 = vpop.f32.mrb[0].mxu0
        %972 = vmatprep.mubr.f32.mxu0 0.0
        %973 = vmatmul.mubr.f32.gmra.mrb[0].mxu0 %v901
        %v974 = vpop.f32.mrb[0].mxu0
        %v975 = vadd.f32 %v894, %v974
        %v976 = vpop.f32.mrb[0].mxu0
        %977 = vdwg.mxu0
        %v978 = vmax.f32 %v970, 0.0
        %v979 = vmax.f32 %v975, 0.0
        %980 = vst.msk [vmem:[%s392] sm:$0xff] %vm517, %v978
        %981 = vst.msk [vmem:[%s392 + $0x8] sm:$0xff] %vm517, %v979
        %s982 = sand.u32 %s258, 1
        %s983 = scalar_lea.sflag [#allocation3], %s982
        %s984 = sand.u32 %s258, 1
        %s985 = smul.addr %s984, 16
        %s986 = scalar_lea.vmem [#allocation2], %s985
        // Predicated region
        $region57: #{tpu_custom_call.1} parent=55 // pred_check
          %p987 = pneg %p268
        $region58: #{tpu_custom_call.1} parent=55 // pred_check_branch
          %989 = sbr.rel (%p987) target = $region60
        $region59: #{tpu_custom_call.1} parent=55 // pred_region
          %s991 = ssub.s32 256, 256
          %992 = vsyncadd %s983, %s991
          %s993 = smul.addr %s27, 2
          %s994 = sadd.s32 %s28, %s993
          %s995 = smul.addr %s994, 128
          %s996 = scalar_lea.hbm %s9, %s995
          %s997 = sshll.u32 %s986, 4
          %s998 = int_to_ptr.vmem [resolvable:$true] %s997
          %1003 = dma.vmem_to_hbm [thread:$0]  %s998, 256, %s996, %s983, 128, 128, 8
        $region60: #{tpu_custom_call.1} parent=55 // pred_fallthru
          _
      $region56: #{tpu_custom_call.1} parent=5 // pred_fallthru
        _
      %p1004 = scmp.le.s32.totalorder 2, %s18
      // Predicated region
      $region61: #{tpu_custom_call.1} parent=5 // pred_check
        %p1005 = pneg %p1004
      $region62: #{tpu_custom_call.1} parent=5 // pred_check_branch
        %1007 = sbr.rel (%p1005) target = $region64
      $region63: #{tpu_custom_call.1} parent=5 // pred_region
        %s1008 = ssub.s32 %s18, 2
        // Predicated region
        $region65: #{tpu_custom_call.1} parent=63 // pred_check
          %p1009 = pneg %p274
        $region66: #{tpu_custom_call.1} parent=63 // pred_check_branch
          %1011 = sbr.rel (%p1009) target = $region68
        $region67: #{tpu_custom_call.1} parent=63 // pred_region
          %s1012 = sand.u32 %s259, 1
          %s1013 = scalar_lea.sflag [#allocation3], %s1012
          %s1014 = sand.u32 %s259, 1
          %s1015 = smul.addr %s1014, 16
          %s1016 = scalar_lea.vmem [#allocation2], %s1015
          %1017 = dma.done %s1013, 256
        $region68: #{tpu_custom_call.1} parent=63 // pred_fallthru
          _
      $region64: #{tpu_custom_call.1} parent=5 // pred_fallthru
        _
    $region6: #{tpu_custom_call.1} parent=1 // loop_footer
      %s22 = sadd.s32 1, %s18
    $region7: #{tpu_custom_call.1} parent=1 // loop_footer_branch
      %17 = sbr.rel target = $region3
    $region8: #{tpu_custom_call.1} parent=1 // loop_exit
      _
    %1018 = vsyncpa [#allocation3], 1
    %s1019 = scalar_lea.sflag [#allocation3], 1
    %1020 = vsyncpa %s1019, 1

</llo_original>
